<compile_context>
chip_gen: v6e
topology: v6e:2x2x1
jax: 0.10.0
libtpu: 0.0.40
codegen_flags: <defaults>
</compile_context>

<pallas_src>
import functools
import math

import jax
import jax.numpy as jnp
from jax.experimental import pallas as pl
from jax.experimental.pallas import tpu as pltpu


def _round_up(v, m):
    return ((v + m - 1) // m) * m


def _pick_tile(n, candidates):
    for c in candidates:
        if n % c == 0:
            return c
    return n


def _ymir_pairs_kernel(r_max,
                       pos_ref, pos_t_ref, bcol_ref, brow_ref,
                       vec_ref, len_ref, sh_ref, mask_ref):
    tm = pos_ref.shape[0]        # rows handled this grid step
    tn = pos_t_ref.shape[1]      # columns handled this grid step

    # ---- pairwise displacement vectors: vec[i, j] = pos[i] - pos[j] --------
    vx = pos_ref[:, 0:1] - pos_t_ref[0:1, :]   # [TM, TN]
    vy = pos_ref[:, 1:2] - pos_t_ref[1:2, :]
    vz = pos_ref[:, 2:3] - pos_t_ref[2:3, :]
    vec_ref[0, :, :] = vx
    vec_ref[1, :, :] = vy
    vec_ref[2, :, :] = vz

    d2 = vx * vx + vy * vy + vz * vz
    length = jnp.sqrt(d2)
    len_ref[...] = length

    # ---- radius_graph edge mask (int8: writeback-bound kernel) --------------
    row0 = pl.program_id(0) * tm
    col0 = pl.program_id(1) * tn
    rows = jax.lax.broadcasted_iota(jnp.int32, (tm, tn), 0) + row0
    cols = jax.lax.broadcasted_iota(jnp.int32, (tm, tn), 1) + col0
    same_graph = bcol_ref[...] == brow_ref[...]          # [TM,1]==[1,TN]->[TM,TN]
    edge = (rows != cols) & same_graph & (length < r_max)
    mask_ref[...] = edge.astype(jnp.int8)

    # normalize=True: unit vectors (zero vector -> 0, matches F.normalize)
    # rsqrt goes to the EUP slot (idle here); avoids divide + nested selects.
    inv = jnp.where(d2 > 0.0, jax.lax.rsqrt(d2), 0.0)
    ux = vx * inv
    uy = vy * inv
    uz = vz * inv
    x2 = ux * ux
    y2 = uy * uy
    z2 = uz * uz

    # ---- e3nn real spherical harmonics, lmax=3, 'component' normalization ---
    # Each component is stored as soon as it is produced to keep live ranges
    # short (no 16 simultaneous [TM,TN] slabs).
    sqrt3 = math.sqrt(3.0)
    sqrt5 = math.sqrt(5.0)
    sqrt7 = math.sqrt(7.0)
    sqrt15 = math.sqrt(15.0)
    c58 = math.sqrt(5.0 / 8.0)
    c38 = math.sqrt(3.0 / 8.0)

    # l = 0
    sh_ref[0, :, :] = jnp.ones_like(ux)
    # l = 1
    sh_ref[1, :, :] = sqrt3 * ux
    sh_ref[2, :, :] = sqrt3 * uy
    sh_ref[3, :, :] = sqrt3 * uz
    # l = 2
    sh_ref[4, :, :] = (sqrt5 * sqrt3) * (ux * uz)
    sh_ref[5, :, :] = (sqrt5 * sqrt3) * (ux * uy)
    sh_ref[6, :, :] = sqrt5 * (y2 - 0.5 * (x2 + z2))
    sh_ref[7, :, :] = (sqrt5 * sqrt3) * (uy * uz)
    sh_ref[8, :, :] = (0.5 * sqrt5 * sqrt3) * (z2 - x2)
    # l = 3
    sh_ref[9, :, :] = (sqrt7 * c58) * (ux * (3.0 * z2 - x2))
    sh_ref[10, :, :] = (sqrt7 * sqrt15) * (ux * uy * uz)
    sh_ref[11, :, :] = (sqrt7 * c38) * (ux * (5.0 * y2 - 1.0))
    sh_ref[12, :, :] = (0.5 * sqrt7) * (uy * (5.0 * y2 - 3.0))
    sh_ref[13, :, :] = (sqrt7 * c38) * (uz * (5.0 * y2 - 1.0))
    sh_ref[14, :, :] = (0.5 * sqrt7 * sqrt15) * (uy * (z2 - x2))
    sh_ref[15, :, :] = (sqrt7 * c58) * (uz * (z2 - 3.0 * x2))


def ymir_forward(x, pos, batch, w_emb, b_emb, r_max=2.5):
    n = pos.shape[0]

    # ---- node embedding: tiny (K=4) dot; hoisted out of the Pallas kernel ---
    node_feats = jnp.dot(x, w_emb) + b_emb

    # ---- tiling / padding ----------------------------------------------------
    # Rows padded to a multiple of 32 (int8 mask tile), cols to a multiple of
    # 128 (lane-dense stores). Row tile up to 256, col tile up to 512: big
    # enough to sit near the HBM writeback roofline, small enough (~22 MiB of
    # double-buffered output blocks + temporaries) for v7x's 64 MiB VMEM.
    np_r = _round_up(n, 32)
    np_c = _round_up(n, 128)
    tm = _pick_tile(np_r, (256, 128, 64, 32))
    tn = _pick_tile(np_c, (512, 256, 128))

    batch = batch.astype(jnp.int32)
    pos = pos.astype(jnp.float32)

    pos_rows = jnp.zeros((np_r, 3), jnp.float32).at[:n].set(pos)
    pos_cols = jnp.zeros((3, np_c), jnp.float32).at[:, :n].set(pos.T)
    # Distinct sentinels for row/col padding => padded pairs never "same graph".
    bcol = jnp.full((np_r, 1), -1, jnp.int32).at[:n, 0].set(batch)
    brow = jnp.full((1, np_c), -2, jnp.int32).at[0, :n].set(batch)

    grid = (np_r // tm, np_c // tn)
    kernel = functools.partial(_ymir_pairs_kernel, float(r_max))

    out_shapes = (
        jax.ShapeDtypeStruct((3, np_r, np_c), jnp.float32),   # vectors
        jax.ShapeDtypeStruct((np_r, np_c), jnp.float32),      # lengths
        jax.ShapeDtypeStruct((16, np_r, np_c), jnp.float32),  # spherical harmonics
        jax.ShapeDtypeStruct((np_r, np_c), jnp.int8),         # edge mask
    )

    vectors, lengths, sh, mask = pl.pallas_call(
        kernel,
        out_shape=out_shapes,
        grid=grid,
        in_specs=[
            pl.BlockSpec((tm, 3), lambda i, j: (i, 0)),     # pos (row block)
            pl.BlockSpec((3, tn), lambda i, j: (0, j)),     # pos^T (col block)
            pl.BlockSpec((tm, 1), lambda i, j: (i, 0)),     # batch col
            pl.BlockSpec((1, tn), lambda i, j: (0, j)),     # batch row
        ],
        out_specs=[
            pl.BlockSpec((3, tm, tn), lambda i, j: (0, i, j)),
            pl.BlockSpec((tm, tn), lambda i, j: (i, j)),
            pl.BlockSpec((16, tm, tn), lambda i, j: (0, i, j)),
            pl.BlockSpec((tm, tn), lambda i, j: (i, j)),
        ],
        compiler_params=pltpu.CompilerParams(
            dimension_semantics=("parallel", "parallel"),
            vmem_limit_bytes=48 * 1024 * 1024,
        ),
    )(pos_rows, pos_cols, bcol, brow)

    # strip padding
    vectors = vectors[:, :n, :n]
    lengths = lengths[:n, :n]
    sh = sh[:, :n, :n]
    mask = mask[:n, :n]
    return node_feats, vectors, lengths, sh, mask


if __name__ == "__main__":
    key = jax.random.PRNGKey(0)
    k1, k2, k3 = jax.random.split(key, 3)

    N, F_IN, H = 8, 4, 32
    R_MAX = 2.5
    x = jax.random.normal(k1, (N, F_IN), dtype=jnp.float32)
    pos = 2.0 * jax.random.normal(k2, (N, 3), dtype=jnp.float32)
    batch = jnp.array([0, 0, 0, 0, 1, 1, 1, 1], dtype=jnp.int32)

    # deterministic "node_embedding" (Linear) parameters
    w_emb = 0.1 * jax.random.normal(k3, (F_IN, H), dtype=jnp.float32)
    b_emb = jnp.zeros((H,), dtype=jnp.float32)

    feats, vectors, lengths, sh, mask = jax.block_until_ready(
        ymir_forward(x, pos, batch, w_emb, b_emb, r_max=R_MAX)
    )

    # ---- sanity checks -------------------------------------------------------
    ref_vec = pos[:, None, :] - pos[None, :, :]                    # [N, N, 3]
    ref_len = jnp.sqrt(jnp.sum(ref_vec * ref_vec, axis=-1))
    assert jnp.allclose(vectors, jnp.transpose(ref_vec, (2, 0, 1)), atol=1e-5)
    assert jnp.allclose(lengths, ref_len, atol=1e-5)

    ref_mask = ((batch[:, None] == batch[None, :])
                & (~jnp.eye(N, dtype=bool))
                & (ref_len < R_MAX))
    assert jnp.array_equal(mask.astype(bool), ref_mask)

    ref_feats = x @ w_emb + b_emb
    assert jnp.allclose(feats, ref_feats, atol=1e-5)

    # per-l SH block norms equal sqrt(2l+1) for nonzero vectors ('component')
    off_diag = ~jnp.eye(N, dtype=bool)
    for l, (s, e) in enumerate(((0, 1), (1, 4), (4, 9), (9, 16))):
        nrm = jnp.sqrt(jnp.sum(sh[s:e] ** 2, axis=0))
        err = jnp.abs(nrm - math.sqrt(2 * l + 1))[off_diag].max()
        assert float(err) < 1e-3, f"l={l} norm error {err}"

    print("KERNEL_OK")
</pallas_src>

<mosaic_0001>
module attributes {stable_mosaic.version = 11 : i64} {
  func.func @_ymir_pairs_kernel(%arg0: i32, %arg1: i32, %arg2: memref<32x3xf32, #tpu.memory_space<vmem>>, %arg3: memref<3x128xf32, #tpu.memory_space<vmem>>, %arg4: memref<32x1xi32, #tpu.memory_space<vmem>>, %arg5: memref<1x128xi32, #tpu.memory_space<vmem>>, %arg6: memref<3x32x128xf32, #tpu.memory_space<vmem>>, %arg7: memref<32x128xf32, #tpu.memory_space<vmem>>, %arg8: memref<16x32x128xf32, #tpu.memory_space<vmem>>, %arg9: memref<32x128xi8, #tpu.memory_space<vmem>>) attributes {dimension_semantics = [#tpu.dimension_semantics<parallel>, #tpu.dimension_semantics<parallel>], iteration_bounds = array<i64: 1, 1>, scalar_prefetch = 0 : i64, scratch_operands = 0 : i64, tpu.core_type = #tpu.core_type<tc>, window_params = [{transform_indices = @transform_0, window_bounds = array<i64: 32, 3>}, {transform_indices = @transform_1, window_bounds = array<i64: 3, 128>}, {transform_indices = @transform_2, window_bounds = array<i64: 32, 1>}, {transform_indices = @transform_3, window_bounds = array<i64: 1, 128>}, {transform_indices = @transform_4, window_bounds = array<i64: 3, 32, 128>}, {transform_indices = @transform_5, window_bounds = array<i64: 32, 128>}, {transform_indices = @transform_6, window_bounds = array<i64: 16, 32, 128>}, {transform_indices = @transform_7, window_bounds = array<i64: 32, 128>}]} {
    %c0 = arith.constant 0 : index
    %c0_0 = arith.constant 0 : index
    %0 = vector.load %arg2[%c0, %c0_0] : memref<32x3xf32, #tpu.memory_space<vmem>>, vector<32x1xf32>
    %c0_1 = arith.constant 0 : index
    %c0_2 = arith.constant 0 : index
    %1 = vector.load %arg3[%c0_1, %c0_2] : memref<3x128xf32, #tpu.memory_space<vmem>>, vector<1x128xf32>
    %2 = vector.broadcast %0 : vector<32x1xf32> to vector<32x128xf32>
    %3 = vector.broadcast %1 : vector<1x128xf32> to vector<32x128xf32>
    %4 = arith.subf %2, %3 : vector<32x128xf32>
    %c0_3 = arith.constant 0 : index
    %c1 = arith.constant 1 : index
    %5 = vector.load %arg2[%c0_3, %c1] : memref<32x3xf32, #tpu.memory_space<vmem>>, vector<32x1xf32>
    %c1_4 = arith.constant 1 : index
    %c0_5 = arith.constant 0 : index
    %6 = vector.load %arg3[%c1_4, %c0_5] : memref<3x128xf32, #tpu.memory_space<vmem>>, vector<1x128xf32>
    %7 = vector.broadcast %5 : vector<32x1xf32> to vector<32x128xf32>
    %8 = vector.broadcast %6 : vector<1x128xf32> to vector<32x128xf32>
    %9 = arith.subf %7, %8 : vector<32x128xf32>
    %c0_6 = arith.constant 0 : index
    %c2 = arith.constant 2 : index
    %10 = vector.load %arg2[%c0_6, %c2] : memref<32x3xf32, #tpu.memory_space<vmem>>, vector<32x1xf32>
    %c2_7 = arith.constant 2 : index
    %c0_8 = arith.constant 0 : index
    %11 = vector.load %arg3[%c2_7, %c0_8] : memref<3x128xf32, #tpu.memory_space<vmem>>, vector<1x128xf32>
    %12 = vector.broadcast %10 : vector<32x1xf32> to vector<32x128xf32>
    %13 = vector.broadcast %11 : vector<1x128xf32> to vector<32x128xf32>
    %14 = arith.subf %12, %13 : vector<32x128xf32>
    %c0_9 = arith.constant 0 : index
    %c0_10 = arith.constant 0 : index
    %c0_11 = arith.constant 0 : index
    %15 = vector.load %arg6[%c0_9, %c0_10, %c0_11] : memref<3x32x128xf32, #tpu.memory_space<vmem>>, vector<1x32x128xf32>
    %16 = vector.shape_cast %15 : vector<1x32x128xf32> to vector<32x128xf32>
    %17 = vector.shape_cast %4 : vector<32x128xf32> to vector<1x32x128xf32>
    tpu.vector_store %arg6[%c0_9, %c0_10, %c0_11], %17 {strides = array<i32>} : memref<3x32x128xf32, #tpu.memory_space<vmem>>, vector<1x32x128xf32>,
    %c1_12 = arith.constant 1 : index
    %c0_13 = arith.constant 0 : index
    %c0_14 = arith.constant 0 : index
    %18 = vector.load %arg6[%c1_12, %c0_13, %c0_14] : memref<3x32x128xf32, #tpu.memory_space<vmem>>, vector<1x32x128xf32>
    %19 = vector.shape_cast %18 : vector<1x32x128xf32> to vector<32x128xf32>
    %20 = vector.shape_cast %9 : vector<32x128xf32> to vector<1x32x128xf32>
    tpu.vector_store %arg6[%c1_12, %c0_13, %c0_14], %20 {strides = array<i32>} : memref<3x32x128xf32, #tpu.memory_space<vmem>>, vector<1x32x128xf32>,
    %c2_15 = arith.constant 2 : index
    %c0_16 = arith.constant 0 : index
    %c0_17 = arith.constant 0 : index
    %21 = vector.load %arg6[%c2_15, %c0_16, %c0_17] : memref<3x32x128xf32, #tpu.memory_space<vmem>>, vector<1x32x128xf32>
    %22 = vector.shape_cast %21 : vector<1x32x128xf32> to vector<32x128xf32>
    %23 = vector.shape_cast %14 : vector<32x128xf32> to vector<1x32x128xf32>
    tpu.vector_store %arg6[%c2_15, %c0_16, %c0_17], %23 {strides = array<i32>} : memref<3x32x128xf32, #tpu.memory_space<vmem>>, vector<1x32x128xf32>,
    %24 = arith.mulf %4, %4 : vector<32x128xf32>
    %25 = arith.mulf %9, %9 : vector<32x128xf32>
    %26 = arith.addf %24, %25 : vector<32x128xf32>
    %27 = arith.mulf %14, %14 : vector<32x128xf32>
    %28 = arith.addf %26, %27 : vector<32x128xf32>
    %29 = math.sqrt %28 : vector<32x128xf32>
    %c0_18 = arith.constant 0 : index
    %c0_19 = arith.constant 0 : index
    %30 = vector.load %arg7[%c0_18, %c0_19] : memref<32x128xf32, #tpu.memory_space<vmem>>, vector<32x128xf32>
    tpu.vector_store %arg7[%c0_18, %c0_19], %29 {strides = array<i32>} : memref<32x128xf32, #tpu.memory_space<vmem>>, vector<32x128xf32>,
    %c32_i32 = arith.constant 32 : i32
    %31 = arith.muli %arg0, %c32_i32 : i32
    %c128_i32 = arith.constant 128 : i32
    %32 = arith.muli %arg1, %c128_i32 : i32
    %33 = tpu.iota {dimensions = array<i32: 0>} : vector<32x128xi32>
    %34 = vector.broadcast %31 : i32 to vector<32x128xi32>
    %35 = arith.addi %33, %34 : vector<32x128xi32>
    %36 = tpu.iota {dimensions = array<i32: 1>} : vector<32x128xi32>
    %37 = vector.broadcast %32 : i32 to vector<32x128xi32>
    %38 = arith.addi %36, %37 : vector<32x128xi32>
    %c0_20 = arith.constant 0 : index
    %c0_21 = arith.constant 0 : index
    %39 = vector.load %arg4[%c0_20, %c0_21] : memref<32x1xi32, #tpu.memory_space<vmem>>, vector<32x1xi32>
    %c0_22 = arith.constant 0 : index
    %c0_23 = arith.constant 0 : index
    %40 = vector.load %arg5[%c0_22, %c0_23] : memref<1x128xi32, #tpu.memory_space<vmem>>, vector<1x128xi32>
    %41 = vector.broadcast %39 : vector<32x1xi32> to vector<32x128xi32>
    %42 = vector.broadcast %40 : vector<1x128xi32> to vector<32x128xi32>
    %43 = arith.cmpi eq, %41, %42 : vector<32x128xi32>
    %44 = arith.cmpi ne, %35, %38 : vector<32x128xi32>
    %45 = arith.andi %44, %43 : vector<32x128xi1>
    %cst = arith.constant 2.500000e+00 : f32
    %46 = vector.broadcast %cst : f32 to vector<32x128xf32>
    %47 = arith.cmpf olt, %29, %46 : vector<32x128xf32>
    %48 = arith.andi %45, %47 : vector<32x128xi1>
    %49 = arith.extui %48 : vector<32x128xi1> to vector<32x128xi8>
    %c0_24 = arith.constant 0 : index
    %c0_25 = arith.constant 0 : index
    %50 = vector.load %arg9[%c0_24, %c0_25] : memref<32x128xi8, #tpu.memory_space<vmem>>, vector<32x128xi8>
    tpu.vector_store %arg9[%c0_24, %c0_25], %49 {strides = array<i32>} : memref<32x128xi8, #tpu.memory_space<vmem>>, vector<32x128xi8>,
    %cst_26 = arith.constant 0.000000e+00 : f32
    %51 = vector.broadcast %cst_26 : f32 to vector<32x128xf32>
    %52 = arith.cmpf ogt, %28, %51 : vector<32x128xf32>
    %53 = math.rsqrt %28 : vector<32x128xf32>
    %cst_27 = arith.constant 0.000000e+00 : f32
    %54 = vector.broadcast %cst_27 : f32 to vector<32x128xf32>
    %55 = arith.select %52, %53, %54 : vector<32x128xi1>, vector<32x128xf32>
    %56 = arith.mulf %4, %55 : vector<32x128xf32>
    %57 = arith.mulf %9, %55 : vector<32x128xf32>
    %58 = arith.mulf %14, %55 : vector<32x128xf32>
    %59 = arith.mulf %56, %56 : vector<32x128xf32>
    %60 = arith.mulf %57, %57 : vector<32x128xf32>
    %61 = arith.mulf %58, %58 : vector<32x128xf32>
    %cst_28 = arith.constant 1.000000e+00 : f32
    %62 = vector.broadcast %cst_28 : f32 to vector<32x128xf32>
    %c0_29 = arith.constant 0 : index
    %c0_30 = arith.constant 0 : index
    %c0_31 = arith.constant 0 : index
    %63 = vector.load %arg8[%c0_29, %c0_30, %c0_31] : memref<16x32x128xf32, #tpu.memory_space<vmem>>, vector<1x32x128xf32>
    %64 = vector.shape_cast %63 : vector<1x32x128xf32> to vector<32x128xf32>
    %65 = vector.shape_cast %62 : vector<32x128xf32> to vector<1x32x128xf32>
    tpu.vector_store %arg8[%c0_29, %c0_30, %c0_31], %65 {strides = array<i32>} : memref<16x32x128xf32, #tpu.memory_space<vmem>>, vector<1x32x128xf32>,
    %cst_32 = arith.constant 1.73205078 : f32
    %66 = vector.broadcast %cst_32 : f32 to vector<32x128xf32>
    %67 = arith.mulf %66, %56 : vector<32x128xf32>
    %c1_33 = arith.constant 1 : index
    %c0_34 = arith.constant 0 : index
    %c0_35 = arith.constant 0 : index
    %68 = vector.load %arg8[%c1_33, %c0_34, %c0_35] : memref<16x32x128xf32, #tpu.memory_space<vmem>>, vector<1x32x128xf32>
    %69 = vector.shape_cast %68 : vector<1x32x128xf32> to vector<32x128xf32>
    %70 = vector.shape_cast %67 : vector<32x128xf32> to vector<1x32x128xf32>
    tpu.vector_store %arg8[%c1_33, %c0_34, %c0_35], %70 {strides = array<i32>} : memref<16x32x128xf32, #tpu.memory_space<vmem>>, vector<1x32x128xf32>,
    %cst_36 = arith.constant 1.73205078 : f32
    %71 = vector.broadcast %cst_36 : f32 to vector<32x128xf32>
    %72 = arith.mulf %71, %57 : vector<32x128xf32>
    %c2_37 = arith.constant 2 : index
    %c0_38 = arith.constant 0 : index
    %c0_39 = arith.constant 0 : index
    %73 = vector.load %arg8[%c2_37, %c0_38, %c0_39] : memref<16x32x128xf32, #tpu.memory_space<vmem>>, vector<1x32x128xf32>
    %74 = vector.shape_cast %73 : vector<1x32x128xf32> to vector<32x128xf32>
    %75 = vector.shape_cast %72 : vector<32x128xf32> to vector<1x32x128xf32>
    tpu.vector_store %arg8[%c2_37, %c0_38, %c0_39], %75 {strides = array<i32>} : memref<16x32x128xf32, #tpu.memory_space<vmem>>, vector<1x32x128xf32>,
    %cst_40 = arith.constant 1.73205078 : f32
    %76 = vector.broadcast %cst_40 : f32 to vector<32x128xf32>
    %77 = arith.mulf %76, %58 : vector<32x128xf32>
    %c3 = arith.constant 3 : index
    %c0_41 = arith.constant 0 : index
    %c0_42 = arith.constant 0 : index
    %78 = vector.load %arg8[%c3, %c0_41, %c0_42] : memref<16x32x128xf32, #tpu.memory_space<vmem>>, vector<1x32x128xf32>
    %79 = vector.shape_cast %78 : vector<1x32x128xf32> to vector<32x128xf32>
    %80 = vector.shape_cast %77 : vector<32x128xf32> to vector<1x32x128xf32>
    tpu.vector_store %arg8[%c3, %c0_41, %c0_42], %80 {strides = array<i32>} : memref<16x32x128xf32, #tpu.memory_space<vmem>>, vector<1x32x128xf32>,
    %81 = arith.mulf %56, %58 : vector<32x128xf32>
    %cst_43 = arith.constant 3.87298346 : f32
    %82 = vector.broadcast %cst_43 : f32 to vector<32x128xf32>
    %83 = arith.mulf %82, %81 : vector<32x128xf32>
    %c4 = arith.constant 4 : index
    %c0_44 = arith.constant 0 : index
    %c0_45 = arith.constant 0 : index
    %84 = vector.load %arg8[%c4, %c0_44, %c0_45] : memref<16x32x128xf32, #tpu.memory_space<vmem>>, vector<1x32x128xf32>
    %85 = vector.shape_cast %84 : vector<1x32x128xf32> to vector<32x128xf32>
    %86 = vector.shape_cast %83 : vector<32x128xf32> to vector<1x32x128xf32>
    tpu.vector_store %arg8[%c4, %c0_44, %c0_45], %86 {strides = array<i32>} : memref<16x32x128xf32, #tpu.memory_space<vmem>>, vector<1x32x128xf32>,
    %87 = arith.mulf %56, %57 : vector<32x128xf32>
    %cst_46 = arith.constant 3.87298346 : f32
    %88 = vector.broadcast %cst_46 : f32 to vector<32x128xf32>
    %89 = arith.mulf %88, %87 : vector<32x128xf32>
    %c5 = arith.constant 5 : index
    %c0_47 = arith.constant 0 : index
    %c0_48 = arith.constant 0 : index
    %90 = vector.load %arg8[%c5, %c0_47, %c0_48] : memref<16x32x128xf32, #tpu.memory_space<vmem>>, vector<1x32x128xf32>
    %91 = vector.shape_cast %90 : vector<1x32x128xf32> to vector<32x128xf32>
    %92 = vector.shape_cast %89 : vector<32x128xf32> to vector<1x32x128xf32>
    tpu.vector_store %arg8[%c5, %c0_47, %c0_48], %92 {strides = array<i32>} : memref<16x32x128xf32, #tpu.memory_space<vmem>>, vector<1x32x128xf32>,
    %93 = arith.addf %59, %61 : vector<32x128xf32>
    %cst_49 = arith.constant 5.000000e-01 : f32
    %94 = vector.broadcast %cst_49 : f32 to vector<32x128xf32>
    %95 = arith.mulf %94, %93 : vector<32x128xf32>
    %96 = arith.subf %60, %95 : vector<32x128xf32>
    %cst_50 = arith.constant 2.23606801 : f32
    %97 = vector.broadcast %cst_50 : f32 to vector<32x128xf32>
    %98 = arith.mulf %97, %96 : vector<32x128xf32>
    %c6 = arith.constant 6 : index
    %c0_51 = arith.constant 0 : index
    %c0_52 = arith.constant 0 : index
    %99 = vector.load %arg8[%c6, %c0_51, %c0_52] : memref<16x32x128xf32, #tpu.memory_space<vmem>>, vector<1x32x128xf32>
    %100 = vector.shape_cast %99 : vector<1x32x128xf32> to vector<32x128xf32>
    %101 = vector.shape_cast %98 : vector<32x128xf32> to vector<1x32x128xf32>
    tpu.vector_store %arg8[%c6, %c0_51, %c0_52], %101 {strides = array<i32>} : memref<16x32x128xf32, #tpu.memory_space<vmem>>, vector<1x32x128xf32>,
    %102 = arith.mulf %57, %58 : vector<32x128xf32>
    %cst_53 = arith.constant 3.87298346 : f32
    %103 = vector.broadcast %cst_53 : f32 to vector<32x128xf32>
    %104 = arith.mulf %103, %102 : vector<32x128xf32>
    %c7 = arith.constant 7 : index
    %c0_54 = arith.constant 0 : index
    %c0_55 = arith.constant 0 : index
    %105 = vector.load %arg8[%c7, %c0_54, %c0_55] : memref<16x32x128xf32, #tpu.memory_space<vmem>>, vector<1x32x128xf32>
    %106 = vector.shape_cast %105 : vector<1x32x128xf32> to vector<32x128xf32>
    %107 = vector.shape_cast %104 : vector<32x128xf32> to vector<1x32x128xf32>
    tpu.vector_store %arg8[%c7, %c0_54, %c0_55], %107 {strides = array<i32>} : memref<16x32x128xf32, #tpu.memory_space<vmem>>, vector<1x32x128xf32>,
    %108 = arith.subf %61, %59 : vector<32x128xf32>
    %cst_56 = arith.constant 1.93649173 : f32
    %109 = vector.broadcast %cst_56 : f32 to vector<32x128xf32>
    %110 = arith.mulf %109, %108 : vector<32x128xf32>
    %c8 = arith.constant 8 : index
    %c0_57 = arith.constant 0 : index
    %c0_58 = arith.constant 0 : index
    %111 = vector.load %arg8[%c8, %c0_57, %c0_58] : memref<16x32x128xf32, #tpu.memory_space<vmem>>, vector<1x32x128xf32>
    %112 = vector.shape_cast %111 : vector<1x32x128xf32> to vector<32x128xf32>
    %113 = vector.shape_cast %110 : vector<32x128xf32> to vector<1x32x128xf32>
    tpu.vector_store %arg8[%c8, %c0_57, %c0_58], %113 {strides = array<i32>} : memref<16x32x128xf32, #tpu.memory_space<vmem>>, vector<1x32x128xf32>,
    %cst_59 = arith.constant 3.000000e+00 : f32
    %114 = vector.broadcast %cst_59 : f32 to vector<32x128xf32>
    %115 = arith.mulf %114, %61 : vector<32x128xf32>
    %116 = arith.subf %115, %59 : vector<32x128xf32>
    %117 = arith.mulf %56, %116 : vector<32x128xf32>
    %cst_60 = arith.constant 2.091650e+00 : f32
    %118 = vector.broadcast %cst_60 : f32 to vector<32x128xf32>
    %119 = arith.mulf %118, %117 : vector<32x128xf32>
    %c9 = arith.constant 9 : index
    %c0_61 = arith.constant 0 : index
    %c0_62 = arith.constant 0 : index
    %120 = vector.load %arg8[%c9, %c0_61, %c0_62] : memref<16x32x128xf32, #tpu.memory_space<vmem>>, vector<1x32x128xf32>
    %121 = vector.shape_cast %120 : vector<1x32x128xf32> to vector<32x128xf32>
    %122 = vector.shape_cast %119 : vector<32x128xf32> to vector<1x32x128xf32>
    tpu.vector_store %arg8[%c9, %c0_61, %c0_62], %122 {strides = array<i32>} : memref<16x32x128xf32, #tpu.memory_space<vmem>>, vector<1x32x128xf32>,
    %123 = arith.mulf %56, %57 : vector<32x128xf32>
    %124 = arith.mulf %123, %58 : vector<32x128xf32>
    %cst_63 = arith.constant 10.2469511 : f32
    %125 = vector.broadcast %cst_63 : f32 to vector<32x128xf32>
    %126 = arith.mulf %125, %124 : vector<32x128xf32>
    %c10 = arith.constant 10 : index
    %c0_64 = arith.constant 0 : index
    %c0_65 = arith.constant 0 : index
    %127 = vector.load %arg8[%c10, %c0_64, %c0_65] : memref<16x32x128xf32, #tpu.memory_space<vmem>>, vector<1x32x128xf32>
    %128 = vector.shape_cast %127 : vector<1x32x128xf32> to vector<32x128xf32>
    %129 = vector.shape_cast %126 : vector<32x128xf32> to vector<1x32x128xf32>
    tpu.vector_store %arg8[%c10, %c0_64, %c0_65], %129 {strides = array<i32>} : memref<16x32x128xf32, #tpu.memory_space<vmem>>, vector<1x32x128xf32>,
    %cst_66 = arith.constant 5.000000e+00 : f32
    %130 = vector.broadcast %cst_66 : f32 to vector<32x128xf32>
    %131 = arith.mulf %130, %60 : vector<32x128xf32>
    %cst_67 = arith.constant 1.000000e+00 : f32
    %132 = vector.broadcast %cst_67 : f32 to vector<32x128xf32>
    %133 = arith.subf %131, %132 : vector<32x128xf32>
    %134 = arith.mulf %56, %133 : vector<32x128xf32>
    %cst_68 = arith.constant 1.62018514 : f32
    %135 = vector.broadcast %cst_68 : f32 to vector<32x128xf32>
    %136 = arith.mulf %135, %134 : vector<32x128xf32>
    %c11 = arith.constant 11 : index
    %c0_69 = arith.constant 0 : index
    %c0_70 = arith.constant 0 : index
    %137 = vector.load %arg8[%c11, %c0_69, %c0_70] : memref<16x32x128xf32, #tpu.memory_space<vmem>>, vector<1x32x128xf32>
    %138 = vector.shape_cast %137 : vector<1x32x128xf32> to vector<32x128xf32>
    %139 = vector.shape_cast %136 : vector<32x128xf32> to vector<1x32x128xf32>
    tpu.vector_store %arg8[%c11, %c0_69, %c0_70], %139 {strides = array<i32>} : memref<16x32x128xf32, #tpu.memory_space<vmem>>, vector<1x32x128xf32>,
    %cst_71 = arith.constant 5.000000e+00 : f32
    %140 = vector.broadcast %cst_71 : f32 to vector<32x128xf32>
    %141 = arith.mulf %140, %60 : vector<32x128xf32>
    %cst_72 = arith.constant 3.000000e+00 : f32
    %142 = vector.broadcast %cst_72 : f32 to vector<32x128xf32>
    %143 = arith.subf %141, %142 : vector<32x128xf32>
    %144 = arith.mulf %57, %143 : vector<32x128xf32>
    %cst_73 = arith.constant 1.32287562 : f32
    %145 = vector.broadcast %cst_73 : f32 to vector<32x128xf32>
    %146 = arith.mulf %145, %144 : vector<32x128xf32>
    %c12 = arith.constant 12 : index
    %c0_74 = arith.constant 0 : index
    %c0_75 = arith.constant 0 : index
    %147 = vector.load %arg8[%c12, %c0_74, %c0_75] : memref<16x32x128xf32, #tpu.memory_space<vmem>>, vector<1x32x128xf32>
    %148 = vector.shape_cast %147 : vector<1x32x128xf32> to vector<32x128xf32>
    %149 = vector.shape_cast %146 : vector<32x128xf32> to vector<1x32x128xf32>
    tpu.vector_store %arg8[%c12, %c0_74, %c0_75], %149 {strides = array<i32>} : memref<16x32x128xf32, #tpu.memory_space<vmem>>, vector<1x32x128xf32>,
    %cst_76 = arith.constant 5.000000e+00 : f32
    %150 = vector.broadcast %cst_76 : f32 to vector<32x128xf32>
    %151 = arith.mulf %150, %60 : vector<32x128xf32>
    %cst_77 = arith.constant 1.000000e+00 : f32
    %152 = vector.broadcast %cst_77 : f32 to vector<32x128xf32>
    %153 = arith.subf %151, %152 : vector<32x128xf32>
    %154 = arith.mulf %58, %153 : vector<32x128xf32>
    %cst_78 = arith.constant 1.62018514 : f32
    %155 = vector.broadcast %cst_78 : f32 to vector<32x128xf32>
    %156 = arith.mulf %155, %154 : vector<32x128xf32>
    %c13 = arith.constant 13 : index
    %c0_79 = arith.constant 0 : index
    %c0_80 = arith.constant 0 : index
    %157 = vector.load %arg8[%c13, %c0_79, %c0_80] : memref<16x32x128xf32, #tpu.memory_space<vmem>>, vector<1x32x128xf32>
    %158 = vector.shape_cast %157 : vector<1x32x128xf32> to vector<32x128xf32>
    %159 = vector.shape_cast %156 : vector<32x128xf32> to vector<1x32x128xf32>
    tpu.vector_store %arg8[%c13, %c0_79, %c0_80], %159 {strides = array<i32>} : memref<16x32x128xf32, #tpu.memory_space<vmem>>, vector<1x32x128xf32>,
    %160 = arith.subf %61, %59 : vector<32x128xf32>
    %161 = arith.mulf %57, %160 : vector<32x128xf32>
    %cst_81 = arith.constant 5.12347555 : f32
    %162 = vector.broadcast %cst_81 : f32 to vector<32x128xf32>
    %163 = arith.mulf %162, %161 : vector<32x128xf32>
    %c14 = arith.constant 14 : index
    %c0_82 = arith.constant 0 : index
    %c0_83 = arith.constant 0 : index
    %164 = vector.load %arg8[%c14, %c0_82, %c0_83] : memref<16x32x128xf32, #tpu.memory_space<vmem>>, vector<1x32x128xf32>
    %165 = vector.shape_cast %164 : vector<1x32x128xf32> to vector<32x128xf32>
    %166 = vector.shape_cast %163 : vector<32x128xf32> to vector<1x32x128xf32>
    tpu.vector_store %arg8[%c14, %c0_82, %c0_83], %166 {strides = array<i32>} : memref<16x32x128xf32, #tpu.memory_space<vmem>>, vector<1x32x128xf32>,
    %cst_84 = arith.constant 3.000000e+00 : f32
    %167 = vector.broadcast %cst_84 : f32 to vector<32x128xf32>
    %168 = arith.mulf %167, %59 : vector<32x128xf32>
    %169 = arith.subf %61, %168 : vector<32x128xf32>
    %170 = arith.mulf %58, %169 : vector<32x128xf32>
    %cst_85 = arith.constant 2.091650e+00 : f32
    %171 = vector.broadcast %cst_85 : f32 to vector<32x128xf32>
    %172 = arith.mulf %171, %170 : vector<32x128xf32>
    %c15 = arith.constant 15 : index
    %c0_86 = arith.constant 0 : index
    %c0_87 = arith.constant 0 : index
    %173 = vector.load %arg8[%c15, %c0_86, %c0_87] : memref<16x32x128xf32, #tpu.memory_space<vmem>>, vector<1x32x128xf32>
    %174 = vector.shape_cast %173 : vector<1x32x128xf32> to vector<32x128xf32>
    %175 = vector.shape_cast %172 : vector<32x128xf32> to vector<1x32x128xf32>
    tpu.vector_store %arg8[%c15, %c0_86, %c0_87], %175 {strides = array<i32>} : memref<16x32x128xf32, #tpu.memory_space<vmem>>, vector<1x32x128xf32>,
    return
  }
  func.func @transform_0(%arg0: i32, %arg1: i32) -> (i32, i32) {
    %c0_i32 = arith.constant 0 : i32
    %c0_i32_0 = arith.constant 0 : i32
    return %arg0, %c0_i32 : i32, i32
  }
  func.func @transform_1(%arg0: i32, %arg1: i32) -> (i32, i32) {
    %c0_i32 = arith.constant 0 : i32
    %c0_i32_0 = arith.constant 0 : i32
    return %c0_i32, %arg1 : i32, i32
  }
  func.func @transform_2(%arg0: i32, %arg1: i32) -> (i32, i32) {
    %c0_i32 = arith.constant 0 : i32
    %c0_i32_0 = arith.constant 0 : i32
    return %arg0, %c0_i32 : i32, i32
  }
  func.func @transform_3(%arg0: i32, %arg1: i32) -> (i32, i32) {
    %c0_i32 = arith.constant 0 : i32
    %c0_i32_0 = arith.constant 0 : i32
    return %c0_i32, %arg1 : i32, i32
  }
  func.func @transform_4(%arg0: i32, %arg1: i32) -> (i32, i32, i32) {
    %c0_i32 = arith.constant 0 : i32
    %c0_i32_0 = arith.constant 0 : i32
    return %c0_i32, %arg0, %arg1 : i32, i32, i32
  }
  func.func @transform_5(%arg0: i32, %arg1: i32) -> (i32, i32) {
    %c0_i32 = arith.constant 0 : i32
    return %arg0, %arg1 : i32, i32
  }
  func.func @transform_6(%arg0: i32, %arg1: i32) -> (i32, i32, i32) {
    %c0_i32 = arith.constant 0 : i32
    %c0_i32_0 = arith.constant 0 : i32
    return %c0_i32, %arg0, %arg1 : i32, i32, i32
  }
  func.func @transform_7(%arg0: i32, %arg1: i32) -> (i32, i32) {
    %c0_i32 = arith.constant 0 : i32
    return %arg0, %arg1 : i32, i32
  }
}

</mosaic_0001>

<llo_original>
// kernel: tpu_custom_call.1
$region0: #{tpu_custom_call.1}
  #allocation0 [shape = 'u32[]', space=smem, size = 0x4, offset = 0x4, fixed_abs, tag = 'smem constant byte address 0x4 - core index']
  #allocation1 [shape = 'u32[144,128]{1,0:T(1,128)}', space=vmem, size = 0x12000, scoped, tag = 'internal scratch']
  %s0 = inlined_call_operand.vmem [shape: f32[32,3], index: 0, kind: input, shape index: {}]
  %s1 = inlined_call_operand.vmem [shape: f32[3,128], index: 1, kind: input, shape index: {}]
  %s2 = inlined_call_operand.vmem [shape: s32[32,1], index: 2, kind: input, shape index: {}]
  %s3 = inlined_call_operand.vmem [shape: s32[1,128], index: 3, kind: input, shape index: {}]
  %s4 = inlined_call_operand.hbm [shape: f32[3,32,128], index: 4, kind: output, shape index: {0}]
  %s5 = inlined_call_operand.hbm [shape: f32[32,128], index: 5, kind: output, shape index: {1}]
  %s6 = inlined_call_operand.hbm [shape: f32[16,32,128], index: 6, kind: output, shape index: {2}]
  %s7 = inlined_call_operand.hbm [shape: s8[32,128], index: 7, kind: output, shape index: {3}]
  %8 = xla_tuple %s4, %s5, %s6, %s7
  %s9 = sld [smem:[#allocation0]]
  $region50: #{tpu_custom_call.1} parent=0
    _
  %s11 = ssub.s32 1, %s9
  %s12 = scalar_select 0, %s11, %s9
  $region1: #{tpu_custom_call.1} parent=0
    #allocation2 [shape = 'u8[49152]{0}', space=vmem, size = 0xc000, scoped, tag = 'output window, operand 0, single buffered']
    #allocation3 [shape = 's32[1]{0}', space=sflag, size = 0x4, scoped, tag = 'scoped memory for tpu_custom_call.1']
    #allocation4 [shape = 'u8[16384]{0}', space=vmem, size = 0x4000, scoped, tag = 'output window, operand 1, single buffered']
    #allocation5 [shape = 's32[1]{0}', space=sflag, size = 0x4, scoped, tag = 'scoped memory for tpu_custom_call.1']
    #allocation6 [shape = 'u8[262144]{0}', space=vmem, size = 0x40000, scoped, tag = 'output window, operand 2, single buffered']
    #allocation7 [shape = 'u8[4096]{0}', space=vmem, size = 0x1000, scoped, tag = 'output window, operand 3, single buffered']
    #allocation8 [shape = 's32[1]{0}', space=sflag, size = 0x4, scoped, tag = 'scoped memory for tpu_custom_call.1']
    %13 = vsyncpa [#allocation3], 0
    %14 = vsyncpa [#allocation5], 0
    %15 = vsyncpa [#allocation8], 0
    // Predicated region
    $region2: #{tpu_custom_call.1} parent=1 // pred_check
      _
    $region3: #{tpu_custom_call.1} parent=1 // pred_check_branch
      %17 = sbr.rel (0) target = $region5
    $region4: #{tpu_custom_call.1} parent=1 // pred_region
      _
    $region5: #{tpu_custom_call.1} parent=1 // pred_fallthru
      _
    // Predicated region
    $region6: #{tpu_custom_call.1} parent=1 // pred_check
      _
    $region7: #{tpu_custom_call.1} parent=1 // pred_check_branch
      %19 = sbr.rel (0) target = $region9
    $region8: #{tpu_custom_call.1} parent=1 // pred_region
      _
    $region9: #{tpu_custom_call.1} parent=1 // pred_fallthru
      _
    // Predicated region
    $region10: #{tpu_custom_call.1} parent=1 // pred_check
      _
    $region11: #{tpu_custom_call.1} parent=1 // pred_check_branch
      %21 = sbr.rel (0) target = $region13
    $region12: #{tpu_custom_call.1} parent=1 // pred_region
      _
    $region13: #{tpu_custom_call.1} parent=1 // pred_fallthru
      _
    // Predicated region
    $region14: #{tpu_custom_call.1} parent=1 // pred_check
      _
    $region15: #{tpu_custom_call.1} parent=1 // pred_check_branch
      %23 = sbr.rel (0) target = $region17
    $region16: #{tpu_custom_call.1} parent=1 // pred_region
      _
    $region17: #{tpu_custom_call.1} parent=1 // pred_fallthru
      _
    %v26 = vld [vmem:[%s0] sm:$0xff]
    %v27 = vld [vmem:[%s0 + $0x8] sm:$0xff]
    %v28 = vld [vmem:[%s0 + $0x10] sm:$0xff]
    %v29 = vld [vmem:[%s0 + $0x18] sm:$0xff]
    %v30 = vld [vmem:[%s1] sm:$0x1]
    %32 = vset.pattern.permute.xlu0 0
    %33 = vperm.xlu0 %32, %v26
    %v34 = vpop.permute.xlu0 %33
    %37 = vset.pattern.permute.xlu0 0
    %38 = vperm.xlu0 %37, %v27
    %v39 = vpop.permute.xlu0 %38
    %42 = vset.pattern.permute.xlu0 0
    %43 = vperm.xlu0 %42, %v28
    %v44 = vpop.permute.xlu0 %43
    %47 = vset.pattern.permute.xlu0 0
    %48 = vperm.xlu0 %47, %v29
    %v49 = vpop.permute.xlu0 %48
    %v51 = vlaneseq
    %v52 = vshrl.u32 %v51, 7
    %v53 = vsub.s32 0, %v52
    %v54 = vrot.slane %v30, %v53
    %v55 = vsub.f32 %v34, %v54
    %v56 = vsub.f32 %v39, %v54
    %v57 = vsub.f32 %v44, %v54
    %v58 = vsub.f32 %v49, %v54
    %v59 = vld [vmem:[%s1 + $0x1] sm:$0x1]
    %60 = vset.pattern.permute.xlu0 1
    %61 = vperm.xlu0 %60, %v26
    %v62 = vpop.permute.xlu0 %61
    %64 = vset.pattern.permute.xlu0 1
    %65 = vperm.xlu0 %64, %v27
    %v66 = vpop.permute.xlu0 %65
    %68 = vset.pattern.permute.xlu0 1
    %69 = vperm.xlu0 %68, %v28
    %v70 = vpop.permute.xlu0 %69
    %72 = vset.pattern.permute.xlu0 1
    %73 = vperm.xlu0 %72, %v29
    %v74 = vpop.permute.xlu0 %73
    %v76 = vlaneseq
    %v77 = vshrl.u32 %v76, 7
    %v78 = vsub.s32 0, %v77
    %v79 = vrot.slane %v59, %v78
    %v80 = vsub.f32 %v62, %v79
    %v81 = vsub.f32 %v66, %v79
    %v82 = vsub.f32 %v70, %v79
    %v83 = vsub.f32 %v74, %v79
    %v84 = vld [vmem:[%s1 + $0x2] sm:$0x1]
    %85 = vset.pattern.permute.xlu0 2
    %86 = vperm.xlu0 %85, %v26
    %v87 = vpop.permute.xlu0 %86
    %89 = vset.pattern.permute.xlu0 2
    %90 = vperm.xlu0 %89, %v27
    %v91 = vpop.permute.xlu0 %90
    %93 = vset.pattern.permute.xlu0 2
    %94 = vperm.xlu0 %93, %v28
    %v95 = vpop.permute.xlu0 %94
    %97 = vset.pattern.permute.xlu0 2
    %98 = vperm.xlu0 %97, %v29
    %v99 = vpop.permute.xlu0 %98
    %v101 = vlaneseq
    %v102 = vshrl.u32 %v101, 7
    %v103 = vsub.s32 0, %v102
    %v104 = vrot.slane %v84, %v103
    %v105 = vsub.f32 %v87, %v104
    %v106 = vsub.f32 %v91, %v104
    %v107 = vsub.f32 %v95, %v104
    %v108 = vsub.f32 %v99, %v104
    %109 = vst [vmem:[#allocation2] sm:$0xff] %v55
    %110 = vst [vmem:[#allocation2 + $0x8] sm:$0xff] %v56
    %111 = vst [vmem:[#allocation2 + $0x10] sm:$0xff] %v57
    %112 = vst [vmem:[#allocation2 + $0x18] sm:$0xff] %v58
    %s113 = scalar_lea.vmem [#allocation2], 32
    %114 = vst [vmem:[%s113] sm:$0xff] %v80
    %115 = vst [vmem:[%s113 + $0x8] sm:$0xff] %v81
    %116 = vst [vmem:[%s113 + $0x10] sm:$0xff] %v82
    %117 = vst [vmem:[%s113 + $0x18] sm:$0xff] %v83
    %s118 = scalar_lea.vmem [#allocation2], 64
    %119 = vst [vmem:[%s118] sm:$0xff] %v105
    %120 = vst [vmem:[%s118 + $0x8] sm:$0xff] %v106
    %121 = vst [vmem:[%s118 + $0x10] sm:$0xff] %v107
    %122 = vst [vmem:[%s118 + $0x18] sm:$0xff] %v108
    %v123 = vmul.f32 %v55, %v55
    %v124 = vmul.f32 %v56, %v56
    %v125 = vmul.f32 %v57, %v57
    %v126 = vmul.f32 %v58, %v58
    %v127 = vmul.f32 %v80, %v80
    %v128 = vmul.f32 %v81, %v81
    %v129 = vmul.f32 %v82, %v82
    %v130 = vmul.f32 %v83, %v83
    %v131 = vadd.f32 %v123, %v127
    %v132 = vadd.f32 %v124, %v128
    %v133 = vadd.f32 %v125, %v129
    %v134 = vadd.f32 %v126, %v130
    %v135 = vmul.f32 %v105, %v105
    %v136 = vmul.f32 %v106, %v106
    %v137 = vmul.f32 %v107, %v107
    %v138 = vmul.f32 %v108, %v108
    %v139 = vadd.f32 %v131, %v135
    %v140 = vadd.f32 %v132, %v136
    %v141 = vadd.f32 %v133, %v137
    %v142 = vadd.f32 %v134, %v138
    %v143 = vrsqrt.pop %v139
    %v144 = vmul.f32 %v139, %v143
    %vm145 = vcmp.eq.f32.partialorder %v139, inf
    %v146 = vsel %vm145, %v139, %v144
    %vm147 = vcmp.eq.f32.partialorder %v139, 0.0
    %v148 = vand.u32 %v139, 2147483648
    %v149 = vsel %vm147, %v148, %v146
    %v150 = vrsqrt.pop %v140
    %v151 = vmul.f32 %v140, %v150
    %vm152 = vcmp.eq.f32.partialorder %v140, inf
    %v153 = vsel %vm152, %v140, %v151
    %vm154 = vcmp.eq.f32.partialorder %v140, 0.0
    %v155 = vand.u32 %v140, 2147483648
    %v156 = vsel %vm154, %v155, %v153
    %v157 = vrsqrt.pop %v141
    %v158 = vmul.f32 %v141, %v157
    %vm159 = vcmp.eq.f32.partialorder %v141, inf
    %v160 = vsel %vm159, %v141, %v158
    %vm161 = vcmp.eq.f32.partialorder %v141, 0.0
    %v162 = vand.u32 %v141, 2147483648
    %v163 = vsel %vm161, %v162, %v160
    %v164 = vrsqrt.pop %v142
    %v165 = vmul.f32 %v142, %v164
    %vm166 = vcmp.eq.f32.partialorder %v142, inf
    %v167 = vsel %vm166, %v142, %v165
    %vm168 = vcmp.eq.f32.partialorder %v142, 0.0
    %v169 = vand.u32 %v142, 2147483648
    %v170 = vsel %vm168, %v169, %v167
    %171 = vst [vmem:[#allocation4] sm:$0xff] %v149
    %172 = vst [vmem:[#allocation4 + $0x8] sm:$0xff] %v156
    %173 = vst [vmem:[#allocation4 + $0x10] sm:$0xff] %v163
    %174 = vst [vmem:[#allocation4 + $0x18] sm:$0xff] %v170
    %s175 = smul.u32 0, 32
    %s176 = smul.u32 0, 128
    %v177 = vlaneseq
    %v178 = vshrl.u32 %v177, 7
    %v179 = vadd.s32 %v178, 8
    %v180 = vadd.s32 %v178, 16
    %v181 = vadd.s32 %v178, 24
    %v182 = vstv %s175
    %v183 = vadd.s32 %v178, %v182
    %v184 = vadd.s32 %v179, %v182
    %v185 = vadd.s32 %v180, %v182
    %v186 = vadd.s32 %v181, %v182
    %v187 = vlaneseq
    %v188 = vand.u32 %v187, 127
    %v189 = vstv %s176
    %v190 = vadd.s32 %v188, %v189
    %v191 = vld [vmem:[%s2] sm:$0xff]
    %v192 = vld [vmem:[%s2 + $0x8] sm:$0xff]
    %v193 = vld [vmem:[%s2 + $0x10] sm:$0xff]
    %v194 = vld [vmem:[%s2 + $0x18] sm:$0xff]
    %v195 = vld [vmem:[%s3] sm:$0x1]
    %196 = vset.pattern.permute.xlu0 0
    %197 = vperm.xlu0 %196, %v191
    %v198 = vpop.permute.xlu0 %197
    %199 = vset.pattern.permute.xlu0 0
    %200 = vperm.xlu0 %199, %v192
    %v201 = vpop.permute.xlu0 %200
    %202 = vset.pattern.permute.xlu0 0
    %203 = vperm.xlu0 %202, %v193
    %v204 = vpop.permute.xlu0 %203
    %205 = vset.pattern.permute.xlu0 0
    %206 = vperm.xlu0 %205, %v194
    %v207 = vpop.permute.xlu0 %206
    %v208 = vlaneseq
    %v209 = vshrl.u32 %v208, 7
    %v210 = vsub.s32 0, %v209
    %v211 = vrot.slane %v195, %v210
    %vm212 = vcmp.eq.s32.totalorder %v198, %v211
    %vm213 = vcmp.eq.s32.totalorder %v201, %v211
    %vm214 = vcmp.eq.s32.totalorder %v204, %v211
    %vm215 = vcmp.eq.s32.totalorder %v207, %v211
    %vm216 = vcmp.ne.s32.totalorder %v183, %v190
    %vm217 = vcmp.ne.s32.totalorder %v184, %v190
    %vm218 = vcmp.ne.s32.totalorder %v185, %v190
    %vm219 = vcmp.ne.s32.totalorder %v186, %v190
    %vm220 = vmand %vm216, %vm212
    %vm221 = vmand %vm217, %vm213
    %vm222 = vmand %vm218, %vm214
    %vm223 = vmand %vm219, %vm215
    %vm224 = vcmp.lt.f32.partialorder %v149, 2.5
    %vm225 = vcmp.lt.f32.partialorder %v156, 2.5
    %vm226 = vcmp.lt.f32.partialorder %v163, 2.5
    %vm227 = vcmp.lt.f32.partialorder %v170, 2.5
    %vm228 = vmand %vm220, %vm224
    %vm229 = vmand %vm221, %vm225
    %vm230 = vmand %vm222, %vm226
    %vm231 = vmand %vm223, %vm227
    %vm232 = vmpackc.low %vm229, %vm228
    %vm233 = vmpackc.low %vm231, %vm230
    %vm234 = vmpackc.even %vm233, %vm232
    %v235 = vsel %vm234, 16843009, 0
    %236 = vst [vmem:[#allocation7] sm:$0xff] %v235
    %vm237 = vcmp.gt.f32.partialorder %v139, 0.0
    %vm238 = vcmp.gt.f32.partialorder %v140, 0.0
    %vm239 = vcmp.gt.f32.partialorder %v141, 0.0
    %vm240 = vcmp.gt.f32.partialorder %v142, 0.0
    %v241 = vrsqrt.pop %v139
    %v242 = vrsqrt.pop %v140
    %v243 = vrsqrt.pop %v141
    %v244 = vrsqrt.pop %v142
    %v245 = vsel %vm237, %v241, 0.0
    %v246 = vsel %vm238, %v242, 0.0
    %v247 = vsel %vm239, %v243, 0.0
    %v248 = vsel %vm240, %v244, 0.0
    %v249 = vmul.f32 %v55, %v245
    %v250 = vmul.f32 %v56, %v246
    %v251 = vmul.f32 %v57, %v247
    %v252 = vmul.f32 %v58, %v248
    %v253 = vmul.f32 %v80, %v245
    %v254 = vmul.f32 %v81, %v246
    %v255 = vmul.f32 %v82, %v247
    %v256 = vmul.f32 %v83, %v248
    %v257 = vmul.f32 %v105, %v245
    %v258 = vmul.f32 %v106, %v246
    %v259 = vmul.f32 %v107, %v247
    %v260 = vmul.f32 %v108, %v248
    %v261 = vmul.f32 %v249, %v249
    %v262 = vmul.f32 %v250, %v250
    %v263 = vmul.f32 %v251, %v251
    %v264 = vmul.f32 %v252, %v252
    %v265 = vmul.f32 %v253, %v253
    %v266 = vmul.f32 %v254, %v254
    %v267 = vmul.f32 %v255, %v255
    %v268 = vmul.f32 %v256, %v256
    %v269 = vmul.f32 %v257, %v257
    %v270 = vmul.f32 %v258, %v258
    %v271 = vmul.f32 %v259, %v259
    %v272 = vmul.f32 %v260, %v260
    %273 = vst [vmem:[#allocation6] sm:$0xff] 1.0
    %274 = vst [vmem:[#allocation6 + $0x8] sm:$0xff] 1.0
    %275 = vst [vmem:[#allocation6 + $0x10] sm:$0xff] 1.0
    %276 = vst [vmem:[#allocation6 + $0x18] sm:$0xff] 1.0
    %v277 = vmul.f32 %v249, 1.7320508
    %v278 = vmul.f32 %v250, 1.7320508
    %v279 = vmul.f32 %v251, 1.7320508
    %v280 = vmul.f32 %v252, 1.7320508
    %s281 = scalar_lea.vmem [#allocation6], 32
    %282 = vst [vmem:[%s281] sm:$0xff] %v277
    %283 = vst [vmem:[%s281 + $0x8] sm:$0xff] %v278
    %284 = vst [vmem:[%s281 + $0x10] sm:$0xff] %v279
    %285 = vst [vmem:[%s281 + $0x18] sm:$0xff] %v280
    %v286 = vmul.f32 %v253, 1.7320508
    %v287 = vmul.f32 %v254, 1.7320508
    %v288 = vmul.f32 %v255, 1.7320508
    %v289 = vmul.f32 %v256, 1.7320508
    %s290 = scalar_lea.vmem [#allocation6], 64
    %291 = vst [vmem:[%s290] sm:$0xff] %v286
    %292 = vst [vmem:[%s290 + $0x8] sm:$0xff] %v287
    %293 = vst [vmem:[%s290 + $0x10] sm:$0xff] %v288
    %294 = vst [vmem:[%s290 + $0x18] sm:$0xff] %v289
    %v295 = vmul.f32 %v257, 1.7320508
    %v296 = vmul.f32 %v258, 1.7320508
    %v297 = vmul.f32 %v259, 1.7320508
    %v298 = vmul.f32 %v260, 1.7320508
    %s299 = scalar_lea.vmem [#allocation6], 96
    %300 = vst [vmem:[%s299] sm:$0xff] %v295
    %301 = vst [vmem:[%s299 + $0x8] sm:$0xff] %v296
    %302 = vst [vmem:[%s299 + $0x10] sm:$0xff] %v297
    %303 = vst [vmem:[%s299 + $0x18] sm:$0xff] %v298
    %v304 = vmul.f32 %v249, %v257
    %v305 = vmul.f32 %v250, %v258
    %v306 = vmul.f32 %v251, %v259
    %v307 = vmul.f32 %v252, %v260
    %v308 = vmul.f32 %v304, 3.8729835
    %v309 = vmul.f32 %v305, 3.8729835
    %v310 = vmul.f32 %v306, 3.8729835
    %v311 = vmul.f32 %v307, 3.8729835
    %s312 = scalar_lea.vmem [#allocation6], 128
    %313 = vst [vmem:[%s312] sm:$0xff] %v308
    %314 = vst [vmem:[%s312 + $0x8] sm:$0xff] %v309
    %315 = vst [vmem:[%s312 + $0x10] sm:$0xff] %v310
    %316 = vst [vmem:[%s312 + $0x18] sm:$0xff] %v311
    %v317 = vmul.f32 %v249, %v253
    %v318 = vmul.f32 %v250, %v254
    %v319 = vmul.f32 %v251, %v255
    %v320 = vmul.f32 %v252, %v256
    %v321 = vmul.f32 %v317, 3.8729835
    %v322 = vmul.f32 %v318, 3.8729835
    %v323 = vmul.f32 %v319, 3.8729835
    %v324 = vmul.f32 %v320, 3.8729835
    %s325 = scalar_lea.vmem [#allocation6], 160
    %326 = vst [vmem:[%s325] sm:$0xff] %v321
    %327 = vst [vmem:[%s325 + $0x8] sm:$0xff] %v322
    %328 = vst [vmem:[%s325 + $0x10] sm:$0xff] %v323
    %329 = vst [vmem:[%s325 + $0x18] sm:$0xff] %v324
    %v330 = vadd.f32 %v261, %v269
    %v331 = vadd.f32 %v262, %v270
    %v332 = vadd.f32 %v263, %v271
    %v333 = vadd.f32 %v264, %v272
    %v334 = vmul.f32 %v330, 0.5
    %v335 = vmul.f32 %v331, 0.5
    %v336 = vmul.f32 %v332, 0.5
    %v337 = vmul.f32 %v333, 0.5
    %v338 = vsub.f32 %v265, %v334
    %v339 = vsub.f32 %v266, %v335
    %v340 = vsub.f32 %v267, %v336
    %v341 = vsub.f32 %v268, %v337
    %v342 = vmul.f32 %v338, 2.236068
    %v343 = vmul.f32 %v339, 2.236068
    %v344 = vmul.f32 %v340, 2.236068
    %v345 = vmul.f32 %v341, 2.236068
    %s346 = scalar_lea.vmem [#allocation6], 192
    %347 = vst [vmem:[%s346] sm:$0xff] %v342
    %348 = vst [vmem:[%s346 + $0x8] sm:$0xff] %v343
    %349 = vst [vmem:[%s346 + $0x10] sm:$0xff] %v344
    %350 = vst [vmem:[%s346 + $0x18] sm:$0xff] %v345
    %v351 = vmul.f32 %v253, %v257
    %v352 = vmul.f32 %v254, %v258
    %v353 = vmul.f32 %v255, %v259
    %v354 = vmul.f32 %v256, %v260
    %v355 = vmul.f32 %v351, 3.8729835
    %v356 = vmul.f32 %v352, 3.8729835
    %v357 = vmul.f32 %v353, 3.8729835
    %v358 = vmul.f32 %v354, 3.8729835
    %s359 = scalar_lea.vmem [#allocation6], 224
    %360 = vst [vmem:[%s359] sm:$0xff] %v355
    %361 = vst [vmem:[%s359 + $0x8] sm:$0xff] %v356
    %362 = vst [vmem:[%s359 + $0x10] sm:$0xff] %v357
    %363 = vst [vmem:[%s359 + $0x18] sm:$0xff] %v358
    %v364 = vsub.f32 %v269, %v261
    %v365 = vsub.f32 %v270, %v262
    %v366 = vsub.f32 %v271, %v263
    %v367 = vsub.f32 %v272, %v264
    %v368 = vmul.f32 %v364, 1.9364917
    %v369 = vmul.f32 %v365, 1.9364917
    %v370 = vmul.f32 %v366, 1.9364917
    %v371 = vmul.f32 %v367, 1.9364917
    %s372 = scalar_lea.vmem [#allocation6], 256
    %373 = vst [vmem:[%s372] sm:$0xff] %v368
    %374 = vst [vmem:[%s372 + $0x8] sm:$0xff] %v369
    %375 = vst [vmem:[%s372 + $0x10] sm:$0xff] %v370
    %376 = vst [vmem:[%s372 + $0x18] sm:$0xff] %v371
    %v377 = vmul.f32 %v269, 3.0
    %v378 = vmul.f32 %v270, 3.0
    %v379 = vmul.f32 %v271, 3.0
    %v380 = vmul.f32 %v272, 3.0
    %v381 = vsub.f32 %v377, %v261
    %v382 = vsub.f32 %v378, %v262
    %v383 = vsub.f32 %v379, %v263
    %v384 = vsub.f32 %v380, %v264
    %v385 = vmul.f32 %v249, %v381
    %v386 = vmul.f32 %v250, %v382
    %v387 = vmul.f32 %v251, %v383
    %v388 = vmul.f32 %v252, %v384
    %v389 = vmul.f32 %v385, 2.09165
    %v390 = vmul.f32 %v386, 2.09165
    %v391 = vmul.f32 %v387, 2.09165
    %v392 = vmul.f32 %v388, 2.09165
    %s393 = scalar_lea.vmem [#allocation6], 288
    %394 = vst [vmem:[%s393] sm:$0xff] %v389
    %395 = vst [vmem:[%s393 + $0x8] sm:$0xff] %v390
    %396 = vst [vmem:[%s393 + $0x10] sm:$0xff] %v391
    %397 = vst [vmem:[%s393 + $0x18] sm:$0xff] %v392
    %v398 = vmul.f32 %v317, %v257
    %v399 = vmul.f32 %v318, %v258
    %v400 = vmul.f32 %v319, %v259
    %v401 = vmul.f32 %v320, %v260
    %v402 = vmul.f32 %v398, 10.246951
    %v403 = vmul.f32 %v399, 10.246951
    %v404 = vmul.f32 %v400, 10.246951
    %v405 = vmul.f32 %v401, 10.246951
    %s406 = scalar_lea.vmem [#allocation6], 320
    %407 = vst [vmem:[%s406] sm:$0xff] %v402
    %408 = vst [vmem:[%s406 + $0x8] sm:$0xff] %v403
    %409 = vst [vmem:[%s406 + $0x10] sm:$0xff] %v404
    %410 = vst [vmem:[%s406 + $0x18] sm:$0xff] %v405
    %v411 = vmul.f32 %v265, 5.0
    %v412 = vmul.f32 %v266, 5.0
    %v413 = vmul.f32 %v267, 5.0
    %v414 = vmul.f32 %v268, 5.0
    %v415 = vsub.f32 %v411, 1.0
    %v416 = vsub.f32 %v412, 1.0
    %v417 = vsub.f32 %v413, 1.0
    %v418 = vsub.f32 %v414, 1.0
    %v419 = vmul.f32 %v249, %v415
    %v420 = vmul.f32 %v250, %v416
    %v421 = vmul.f32 %v251, %v417
    %v422 = vmul.f32 %v252, %v418
    %v423 = vmul.f32 %v419, 1.6201851
    %v424 = vmul.f32 %v420, 1.6201851
    %v425 = vmul.f32 %v421, 1.6201851
    %v426 = vmul.f32 %v422, 1.6201851
    %s427 = scalar_lea.vmem [#allocation6], 352
    %428 = vst [vmem:[%s427] sm:$0xff] %v423
    %429 = vst [vmem:[%s427 + $0x8] sm:$0xff] %v424
    %430 = vst [vmem:[%s427 + $0x10] sm:$0xff] %v425
    %431 = vst [vmem:[%s427 + $0x18] sm:$0xff] %v426
    %v432 = vsub.f32 %v411, 3.0
    %v433 = vsub.f32 %v412, 3.0
    %v434 = vsub.f32 %v413, 3.0
    %v435 = vsub.f32 %v414, 3.0
    %v436 = vmul.f32 %v253, %v432
    %v437 = vmul.f32 %v254, %v433
    %v438 = vmul.f32 %v255, %v434
    %v439 = vmul.f32 %v256, %v435
    %v440 = vmul.f32 %v436, 1.3228756
    %v441 = vmul.f32 %v437, 1.3228756
    %v442 = vmul.f32 %v438, 1.3228756
    %v443 = vmul.f32 %v439, 1.3228756
    %s444 = scalar_lea.vmem [#allocation6], 384
    %445 = vst [vmem:[%s444] sm:$0xff] %v440
    %446 = vst [vmem:[%s444 + $0x8] sm:$0xff] %v441
    %447 = vst [vmem:[%s444 + $0x10] sm:$0xff] %v442
    %448 = vst [vmem:[%s444 + $0x18] sm:$0xff] %v443
    %v449 = vmul.f32 %v257, %v415
    %v450 = vmul.f32 %v258, %v416
    %v451 = vmul.f32 %v259, %v417
    %v452 = vmul.f32 %v260, %v418
    %v453 = vmul.f32 %v449, 1.6201851
    %v454 = vmul.f32 %v450, 1.6201851
    %v455 = vmul.f32 %v451, 1.6201851
    %v456 = vmul.f32 %v452, 1.6201851
    %s457 = scalar_lea.vmem [#allocation6], 416
    %458 = vst [vmem:[%s457] sm:$0xff] %v453
    %459 = vst [vmem:[%s457 + $0x8] sm:$0xff] %v454
    %460 = vst [vmem:[%s457 + $0x10] sm:$0xff] %v455
    %461 = vst [vmem:[%s457 + $0x18] sm:$0xff] %v456
    %v462 = vmul.f32 %v253, %v364
    %v463 = vmul.f32 %v254, %v365
    %v464 = vmul.f32 %v255, %v366
    %v465 = vmul.f32 %v256, %v367
    %v466 = vmul.f32 %v462, 5.1234756
    %v467 = vmul.f32 %v463, 5.1234756
    %v468 = vmul.f32 %v464, 5.1234756
    %v469 = vmul.f32 %v465, 5.1234756
    %s470 = scalar_lea.vmem [#allocation6], 448
    %471 = vst [vmem:[%s470] sm:$0xff] %v466
    %472 = vst [vmem:[%s470 + $0x8] sm:$0xff] %v467
    %473 = vst [vmem:[%s470 + $0x10] sm:$0xff] %v468
    %474 = vst [vmem:[%s470 + $0x18] sm:$0xff] %v469
    %v475 = vmul.f32 %v261, 3.0
    %v476 = vmul.f32 %v262, 3.0
    %v477 = vmul.f32 %v263, 3.0
    %v478 = vmul.f32 %v264, 3.0
    %v479 = vsub.f32 %v269, %v475
    %v480 = vsub.f32 %v270, %v476
    %v481 = vsub.f32 %v271, %v477
    %v482 = vsub.f32 %v272, %v478
    %v483 = vmul.f32 %v257, %v479
    %v484 = vmul.f32 %v258, %v480
    %v485 = vmul.f32 %v259, %v481
    %v486 = vmul.f32 %v260, %v482
    %v487 = vmul.f32 %v483, 2.09165
    %v488 = vmul.f32 %v484, 2.09165
    %v489 = vmul.f32 %v485, 2.09165
    %v490 = vmul.f32 %v486, 2.09165
    %s491 = scalar_lea.vmem [#allocation6], 480
    %492 = vst [vmem:[%s491] sm:$0xff] %v487
    %493 = vst [vmem:[%s491 + $0x8] sm:$0xff] %v488
    %494 = vst [vmem:[%s491 + $0x10] sm:$0xff] %v489
    %495 = vst [vmem:[%s491 + $0x18] sm:$0xff] %v490
    // Predicated region
    $region18: #{tpu_custom_call.1} parent=1 // pred_check
      _
    $region19: #{tpu_custom_call.1} parent=1 // pred_check_branch
      %497 = sbr.rel (0) target = $region21
    $region20: #{tpu_custom_call.1} parent=1 // pred_region
      %s499 = ssub.s32 1536, 1536
      %500 = vsyncadd [#allocation3], %s499
      %s501 = sshll.u32 [#allocation2], 4
      %s502 = int_to_ptr.vmem [resolvable:$true] %s501
      %507 = dma.vmem_to_hbm [thread:$0]  %s502, 1536, %s4, [#allocation3], 128, 128, 8
    $region21: #{tpu_custom_call.1} parent=1 // pred_fallthru
      _
    // Predicated region
    $region22: #{tpu_custom_call.1} parent=1 // pred_check
      _
    $region23: #{tpu_custom_call.1} parent=1 // pred_check_branch
      %509 = sbr.rel (0) target = $region25
    $region24: #{tpu_custom_call.1} parent=1 // pred_region
      %s511 = ssub.s32 512, 512
      %512 = vsyncadd [#allocation5], %s511
      %s513 = sshll.u32 [#allocation4], 4
      %s514 = int_to_ptr.vmem [resolvable:$true] %s513
      %519 = dma.vmem_to_hbm [thread:$0]  %s514, 512, %s5, [#allocation5], 128, 128, 8
    $region25: #{tpu_custom_call.1} parent=1 // pred_fallthru
      _
    // Predicated region
    $region26: #{tpu_custom_call.1} parent=1 // pred_check
      _
    $region27: #{tpu_custom_call.1} parent=1 // pred_check_branch
      %521 = sbr.rel (0) target = $region29
    $region28: #{tpu_custom_call.1} parent=1 // pred_region
      %s523 = ssub.s32 8192, 8192
      %524 = vsyncadd [#allocation5], %s523
      %s525 = sshll.u32 [#allocation6], 4
      %s526 = int_to_ptr.vmem [resolvable:$true] %s525
      %531 = dma.vmem_to_hbm [thread:$0]  %s526, 8192, %s6, [#allocation5], 128, 128, 8
    $region29: #{tpu_custom_call.1} parent=1 // pred_fallthru
      _
    // Predicated region
    $region30: #{tpu_custom_call.1} parent=1 // pred_check
      _
    $region31: #{tpu_custom_call.1} parent=1 // pred_check_branch
      %533 = sbr.rel (0) target = $region33
    $region32: #{tpu_custom_call.1} parent=1 // pred_region
      %s535 = ssub.s32 128, 128
      %536 = vsyncadd [#allocation8], %s535
      %s538 = sshll.u32 [#allocation7], 4
      %s539 = int_to_ptr.vmem [resolvable:$true] %s538
      %541 = dma.vmem_to_hbm [thread:$0]  %s539, 128, %s7, [#allocation8]
    $region33: #{tpu_custom_call.1} parent=1 // pred_fallthru
      _
    // Predicated region
    $region34: #{tpu_custom_call.1} parent=1 // pred_check
      _
    $region35: #{tpu_custom_call.1} parent=1 // pred_check_branch
      %543 = sbr.rel (0) target = $region37
    $region36: #{tpu_custom_call.1} parent=1 // pred_region
      %544 = dma.done [#allocation3], 1536
    $region37: #{tpu_custom_call.1} parent=1 // pred_fallthru
      _
    // Predicated region
    $region38: #{tpu_custom_call.1} parent=1 // pred_check
      _
    $region39: #{tpu_custom_call.1} parent=1 // pred_check_branch
      %546 = sbr.rel (0) target = $region41
    $region40: #{tpu_custom_call.1} parent=1 // pred_region
      %547 = dma.done [#allocation5], 512
    $region41: #{tpu_custom_call.1} parent=1 // pred_fallthru
      _
    // Predicated region
    $region42: #{tpu_custom_call.1} parent=1 // pred_check
      _
    $region43: #{tpu_custom_call.1} parent=1 // pred_check_branch
      %549 = sbr.rel (0) target = $region45
    $region44: #{tpu_custom_call.1} parent=1 // pred_region
      %550 = dma.done [#allocation5], 8192
    $region45: #{tpu_custom_call.1} parent=1 // pred_fallthru
      _
    // Predicated region
    $region46: #{tpu_custom_call.1} parent=1 // pred_check
      _
    $region47: #{tpu_custom_call.1} parent=1 // pred_check_branch
      %552 = sbr.rel (0) target = $region49
    $region48: #{tpu_custom_call.1} parent=1 // pred_region
      %553 = dma.done [#allocation8], 128
    $region49: #{tpu_custom_call.1} parent=1 // pred_fallthru
      _
    %554 = vsyncpa [#allocation3], 1
    %555 = vsyncpa [#allocation5], 1
    %556 = vsyncpa [#allocation8], 1

</llo_original>
